<compile_context>
chip_gen: v5e
topology: v5e:2x2
jax: 0.10.0
libtpu: 0.0.40
codegen_flags: <defaults>
</compile_context>

<pallas_src>
import functools

import jax
import jax.numpy as jnp
from jax.experimental import pallas as pl
from jax.experimental.pallas import tpu as pltpu


# ----------------------------------------------------------------------------
# Tiled linear (projection) kernels
# ----------------------------------------------------------------------------
def _matmul_kernel(x_ref, w_ref, o_ref):
    o_ref[...] = jnp.dot(
        x_ref[...], w_ref[...], preferred_element_type=jnp.float32
    ).astype(o_ref.dtype)


def _matmul_bias_kernel(x_ref, w_ref, b_ref, o_ref):
    acc = jnp.dot(x_ref[...], w_ref[...], preferred_element_type=jnp.float32)
    o_ref[...] = (acc + b_ref[...]).astype(o_ref.dtype)


def _row_tile(total, target):
    """Row (sublane) tile: full extent if small, else a multiple of 8."""
    if total <= target:
        return total
    return max(8, (target // 8) * 8)


def _col_tile(total, target):
    """Lane tile: full extent if small, else a multiple of 128."""
    if total <= target:
        return total
    return max(128, (target // 128) * 128)


def pallas_linear(x, w, b=None, *, tm=256, tn=512):
    """x: [N, Cin] @ w: [Cin, Cout] (+ b: [Cout]) -> [N, Cout].

    Grid is (col_tiles, row_tiles): the row-tile axis is innermost so the
    [Cin, tn] weight tile stays resident in VMEM across all row tiles (it is
    only re-DMAed when the column tile changes).
    """
    N, Cin = x.shape
    Cout = w.shape[1]
    tm = _row_tile(N, tm)
    tn = _col_tile(Cout, tn)
    grid = (pl.cdiv(Cout, tn), pl.cdiv(N, tm))

    x_spec = pl.BlockSpec((tm, Cin), lambda j, i: (i, 0))
    w_spec = pl.BlockSpec((Cin, tn), lambda j, i: (0, j))
    o_spec = pl.BlockSpec((tm, tn), lambda j, i: (i, j))
    cp = pltpu.CompilerParams(dimension_semantics=("parallel", "parallel"))
    out_shape = jax.ShapeDtypeStruct((N, Cout), x.dtype)

    if b is None:
        return pl.pallas_call(
            _matmul_kernel,
            out_shape=out_shape,
            grid=grid,
            in_specs=[x_spec, w_spec],
            out_specs=o_spec,
            compiler_params=cp,
        )(x, w)

    b_spec = pl.BlockSpec((1, tn), lambda j, i: (0, j))
    return pl.pallas_call(
        _matmul_bias_kernel,
        out_shape=out_shape,
        grid=grid,
        in_specs=[x_spec, w_spec, b_spec],
        out_specs=o_spec,
        compiler_params=cp,
    )(x, w, b.reshape(1, Cout))


# ----------------------------------------------------------------------------
# Attention kernels (head split/merge done in-kernel on the lane axis)
# ----------------------------------------------------------------------------
def _softmax_rows(s):
    """Stable softmax pieces over the last axis.

    Returns (p, r): un-normalized probabilities and the row reciprocal of the
    partition function; approx reciprocal (EUP slot) + one Newton step keeps
    fp32-level accuracy.
    """
    s = s - jnp.max(s, axis=-1, keepdims=True)
    p = jnp.exp(s)
    l = jnp.sum(p, axis=-1, keepdims=True)
    r = pl.reciprocal(l, approx=True)
    r = r * (2.0 - l * r)  # Newton refinement of the approximate reciprocal
    return p, r


def _spatial_attn_kernel(qkv_ref, o_ref, *, num_heads, head_dim):
    """Block = [Tblk, J, 3C]: attention over joints; all frames in the block
    and all heads are processed per grid step (batched dot_general)."""
    C = num_heads * head_dim
    outs = []
    for h in range(num_heads):
        lo = h * head_dim
        q = qkv_ref[:, :, lo:lo + head_dim]                   # [Tb, J, Dh]
        k = qkv_ref[:, :, C + lo:C + lo + head_dim]           # [Tb, J, Dh]
        v = qkv_ref[:, :, 2 * C + lo:2 * C + lo + head_dim]   # [Tb, J, Dh]
        s = jax.lax.dot_general(                               # [Tb, J, J]
            q, k, (((2,), (2,)), ((0,), (0,))),
            preferred_element_type=jnp.float32)
        p, r = _softmax_rows(s)
        o = jax.lax.dot_general(                               # [Tb, J, Dh]
            p.astype(v.dtype), v, (((2,), (1,)), ((0,), (0,))),
            preferred_element_type=jnp.float32)
        outs.append(o * r)
    # single lane-dense [Tb, J, C] store (heads concatenated along the lane axis)
    o_ref[...] = jnp.concatenate(outs, axis=-1).astype(o_ref.dtype)


def _temporal_attn_kernel(qkv_ref, o_ref, *, num_heads, head_dim, j_block):
    """Block = [T, Jblk, 3C]: attention over frames, per (joint, head).

    Joints/heads are unrolled as 2-D MXU matmuls (the MXU processes batched
    dots as a loop anyway); every output store is a lane-dense [T, C] slab.
    """
    C = num_heads * head_dim
    for j in range(j_block):
        outs = []
        for h in range(num_heads):
            lo = h * head_dim
            q = qkv_ref[:, j, lo:lo + head_dim]                   # [T, Dh]
            k = qkv_ref[:, j, C + lo:C + lo + head_dim]           # [T, Dh]
            v = qkv_ref[:, j, 2 * C + lo:2 * C + lo + head_dim]   # [T, Dh]
            s = jax.lax.dot_general(                               # [T, T]
                q, k, (((1,), (1,)), ((), ())),
                preferred_element_type=jnp.float32)
            p, r = _softmax_rows(s)
            o = jax.lax.dot_general(                               # [T, Dh]
                p.astype(v.dtype), v, (((1,), (0,)), ((), ())),
                preferred_element_type=jnp.float32)
            outs.append(o * r)
        o_ref[:, j, :] = jnp.concatenate(outs, axis=-1).astype(o_ref.dtype)


def pallas_spatial_attention(qkv, num_heads, *, t_block=64):
    """qkv: [B, T, J, 3C] -> [B, T, J, C]; attention over J per (b, t, head)."""
    B, T, J, C3 = qkv.shape
    C = C3 // 3
    head_dim = C // num_heads
    tb = min(T, t_block)  # block of frames per grid step (VMEM-budget friendly)
    grid = (B, pl.cdiv(T, tb))
    kern = functools.partial(
        _spatial_attn_kernel, num_heads=num_heads, head_dim=head_dim)
    return pl.pallas_call(
        kern,
        out_shape=jax.ShapeDtypeStruct((B, T, J, C), qkv.dtype),
        grid=grid,
        in_specs=[pl.BlockSpec((None, tb, J, C3), lambda b, t: (b, t, 0, 0))],
        out_specs=pl.BlockSpec((None, tb, J, C), lambda b, t: (b, t, 0, 0)),
        compiler_params=pltpu.CompilerParams(
            dimension_semantics=("parallel", "parallel")),
    )(qkv)


def pallas_temporal_attention(qkv, num_heads, *, j_block=8):
    """qkv: [B, T, J, 3C] -> [B, T, J, C]; attention over T per (b, j, head)."""
    B, T, J, C3 = qkv.shape
    C = C3 // 3
    head_dim = C // num_heads
    jb = J if J <= j_block else max(8, (j_block // 8) * 8)  # 8-aligned or full
    grid = (B, pl.cdiv(J, jb))
    kern = functools.partial(
        _temporal_attn_kernel, num_heads=num_heads, head_dim=head_dim, j_block=jb)
    return pl.pallas_call(
        kern,
        out_shape=jax.ShapeDtypeStruct((B, T, J, C), qkv.dtype),
        grid=grid,
        in_specs=[pl.BlockSpec((None, T, jb, C3), lambda b, j: (b, 0, j, 0))],
        out_specs=pl.BlockSpec((None, T, jb, C), lambda b, j: (b, 0, j, 0)),
        compiler_params=pltpu.CompilerParams(
            dimension_semantics=("parallel", "parallel")),
    )(qkv)


# ----------------------------------------------------------------------------
# Module forward (no HBM transposes between the pallas_calls)
# ----------------------------------------------------------------------------
def attention_forward(x, params, *, num_heads, mode="spatial", mask=None):
    """Mirrors Attention.forward.  x: [B, T, J, C]."""
    # TODO(synk): `mask` is accepted but unused (the PyTorch forward_temporal
    # never reads it); attn_drop / proj_drop are identity (p=0.0, eval mode).
    del mask
    B, T, J, C = x.shape
    scale = params["scale"]

    # qkv projection (qkv_bias=False).  Fold the softmax scale into the Q rows
    # of the [3C, C] weight once so the attention kernel skips per-score scaling.
    wqkv = params["qkv_w"]                        # [3C, C], torch convention
    wqkv = wqkv.at[:C].multiply(scale)
    qkv = pallas_linear(x.reshape(B * T * J, C), wqkv.T)   # [N, 3C], no bias
    qkv = qkv.reshape(B, T, J, 3 * C)                      # free reshape

    if mode == "spatial":
        o = pallas_spatial_attention(qkv, num_heads)       # [B, T, J, C]
    elif mode == "temporal":
        o = pallas_temporal_attention(qkv, num_heads)      # [B, T, J, C]
    else:
        raise NotImplementedError(mode)

    # output projection (with bias); proj_drop == identity
    wproj, bproj = params["proj_w"], params["proj_b"]      # [Do, C], [Do]
    out = pallas_linear(o.reshape(B * T * J, C), wproj.T, bproj)
    return out.reshape(B, T, J, wproj.shape[0])


# ----------------------------------------------------------------------------
# Pure-JAX reference (mirrors the PyTorch code path exactly)
# ----------------------------------------------------------------------------
def attention_reference(x, params, *, num_heads, mode="spatial"):
    B, T, J, C = x.shape
    H = num_heads
    Dh = C // H
    scale = params["scale"]
    qkv = x @ params["qkv_w"].T
    qkv = qkv.reshape(B, T, J, 3, H, Dh)
    qkv = jnp.transpose(qkv, (3, 0, 4, 1, 2, 5))
    q, k, v = qkv[0], qkv[1], qkv[2]
    if mode == "spatial":
        attn = jnp.einsum("bhtjd,bhtkd->bhtjk", q, k) * scale
        attn = jax.nn.softmax(attn, axis=-1)
        o = jnp.einsum("bhtjk,bhtkd->bhtjd", attn, v)
        o = jnp.transpose(o, (0, 2, 3, 1, 4)).reshape(B, T, J, C)
    else:  # temporal
        qt = jnp.transpose(q, (0, 1, 3, 2, 4))
        kt = jnp.transpose(k, (0, 1, 3, 2, 4))
        vt = jnp.transpose(v, (0, 1, 3, 2, 4))
        attn = jnp.einsum("bhjtd,bhjsd->bhjts", qt, kt) * scale
        attn = jax.nn.softmax(attn, axis=-1)
        o = jnp.einsum("bhjts,bhjsd->bhjtd", attn, vt)
        o = jnp.transpose(o, (0, 3, 2, 1, 4)).reshape(B, T, J, C)
    return o @ params["proj_w"].T + params["proj_b"]


# ----------------------------------------------------------------------------
if __name__ == "__main__":
    # Small shapes consistent with the module's [B, T, J, C] convention; sized
    # so the linear kernel runs multiple row tiles and the temporal attention
    # runs multiple joint blocks.
    B, T, J, C = 2, 16, 16, 64
    num_heads = 4
    dim_out = 128
    head_dim = C // num_heads
    scale = head_dim ** (-0.5)

    key = jax.random.PRNGKey(0)
    kx, kq, kp, kb = jax.random.split(key, 4)
    x = jax.random.normal(kx, (B, T, J, C), dtype=jnp.float32)

    params = {
        "qkv_w": 0.05 * jax.random.normal(kq, (3 * C, C), dtype=jnp.float32),
        "proj_w": 0.05 * jax.random.normal(kp, (dim_out, C), dtype=jnp.float32),
        "proj_b": 0.01 * jax.random.normal(kb, (dim_out,), dtype=jnp.float32),
        "scale": scale,
    }

    # spatial mode
    out_s = jax.block_until_ready(
        attention_forward(x, params, num_heads=num_heads, mode="spatial"))
    ref_s = attention_reference(x, params, num_heads=num_heads, mode="spatial")
    assert out_s.shape == (B, T, J, dim_out), out_s.shape
    err_s = float(jnp.max(jnp.abs(out_s - ref_s)))
    assert jnp.allclose(out_s, ref_s, atol=5e-4, rtol=5e-4), err_s

    # temporal mode
    out_t = jax.block_until_ready(
        attention_forward(x, params, num_heads=num_heads, mode="temporal"))
    ref_t = attention_reference(x, params, num_heads=num_heads, mode="temporal")
    assert out_t.shape == (B, T, J, dim_out), out_t.shape
    err_t = float(jnp.max(jnp.abs(out_t - ref_t)))
    assert jnp.allclose(out_t, ref_t, atol=5e-4, rtol=5e-4), err_t

    print("KERNEL_OK")
</pallas_src>

<mosaic_0001>
module attributes {stable_mosaic.version = 11 : i64} {
  func.func @_matmul_kernel(%arg0: i32, %arg1: i32, %arg2: memref<256x64xf32, #tpu.memory_space<vmem>>, %arg3: memref<64x192xf32, #tpu.memory_space<vmem>>, %arg4: memref<256x192xf32, #tpu.memory_space<vmem>>) attributes {dimension_semantics = [#tpu.dimension_semantics<parallel>, #tpu.dimension_semantics<parallel>], iteration_bounds = array<i64: 1, 2>, scalar_prefetch = 0 : i64, scratch_operands = 0 : i64, tpu.core_type = #tpu.core_type<tc>, window_params = [{transform_indices = @transform_0, window_bounds = array<i64: 256, 64>}, {transform_indices = @transform_1, window_bounds = array<i64: 64, 192>}, {transform_indices = @transform_2, window_bounds = array<i64: 256, 192>}]} {
    %c0 = arith.constant 0 : index
    %c0_0 = arith.constant 0 : index
    %0 = vector.load %arg2[%c0, %c0_0] : memref<256x64xf32, #tpu.memory_space<vmem>>, vector<256x64xf32>
    %c0_1 = arith.constant 0 : index
    %c0_2 = arith.constant 0 : index
    %1 = vector.load %arg3[%c0_1, %c0_2] : memref<64x192xf32, #tpu.memory_space<vmem>>, vector<64x192xf32>
    %cst = arith.constant dense<0.000000e+00> : vector<256x192xf32>
    %2 = tpu.matmul %0, %1, %cst {dimension_numbers = #tpu.dot_dimension_numbers<[1], [0], [0], [1], [0, 0, 1, 1], [], []>} : vector<256x64xf32>, vector<64x192xf32>, vector<256x192xf32> -> vector<256x192xf32>
    %c0_3 = arith.constant 0 : index
    %c0_4 = arith.constant 0 : index
    %3 = vector.load %arg4[%c0_3, %c0_4] : memref<256x192xf32, #tpu.memory_space<vmem>>, vector<256x192xf32>
    tpu.vector_store %arg4[%c0_3, %c0_4], %2 {strides = array<i32>} : memref<256x192xf32, #tpu.memory_space<vmem>>, vector<256x192xf32>,
    return
  }
  func.func @transform_0(%arg0: i32, %arg1: i32) -> (i32, i32) {
    %c0_i32 = arith.constant 0 : i32
    %c0_i32_0 = arith.constant 0 : i32
    return %arg1, %c0_i32 : i32, i32
  }
  func.func @transform_1(%arg0: i32, %arg1: i32) -> (i32, i32) {
    %c0_i32 = arith.constant 0 : i32
    %c0_i32_0 = arith.constant 0 : i32
    return %c0_i32, %arg0 : i32, i32
  }
  func.func @transform_2(%arg0: i32, %arg1: i32) -> (i32, i32) {
    %c0_i32 = arith.constant 0 : i32
    return %arg1, %arg0 : i32, i32
  }
}

</mosaic_0001>

<llo_original>
// kernel: tpu_custom_call.1
$region0: #{tpu_custom_call.1}
  #allocation0 [shape = 'u32[]', space=smem, size = 0x4, offset = 0x4, fixed_abs, tag = 'smem constant byte address 0x4 - core index']
  #allocation1 [shape = 'u32[72,128]{1,0:T(1,128)}', space=vmem, size = 0x9000, scoped, tag = 'internal scratch']
  %s0 = inlined_call_operand.vmem [shape: f32[512,64], index: 0, kind: input, shape index: {}]
  %s1 = inlined_call_operand.vmem [shape: f32[64,192], index: 1, kind: input, shape index: {}]
  %s2 = inlined_call_operand.vmem [shape: f32[512,192], index: 2, kind: output, shape index: {}]
  %s3 = sld [smem:[#allocation0]]
  $region41: #{tpu_custom_call.1} parent=0
    _
  %s5 = ssub.s32 1, %s3
  %s6 = scalar_select 0, %s5, %s3
  loop: start=0, step=1, limit=4
  $region2: #{tpu_custom_call.1} parent=0 // loop_pre_header
    _
  $region3: #{tpu_custom_call.1} parent=0 // loop_header
    %s8 = sphi 0, %s12
    %p9 = scmp.ge.s32.totalorder %s8, 4
    %s15 = sphi 0, %s27
    %s16 = sphi 0, %s23
    %s17 = sphi 0, %s15
    %s18 = sphi 0, %s16
    %s19 = sphi 0, %s17
    %s20 = sphi 0, %s18
    %s30 = sphi 0, %s32
    %s33 = sphi 0, %s30
    %s34 = sphi 0, %s33
    %s50 = sphi 0, %s34
    %s56 = sphi 0, %s58
    %s59 = sphi 0, %s56
    %s60 = sphi 0, %s59
    %s76 = sphi 0, %s60
    %s84 = sphi 0, %s86
    %s87 = sphi 0, %s84
    %s88 = sphi 0, %s87
    %s104 = sphi 0, %s88
  $region4: #{tpu_custom_call.1} parent=0 // loop_header_branch
    %11 = sbr.rel (%p9) target = $region8
  $region5: #{tpu_custom_call.1} parent=0 // loop_body
    %s13 = ssub.s32 %s8, 1
    %s14 = ssub.s32 %s8, 2
    %s21 = sadd.s32 1, %s16
    %p22 = scmp.ge.s32.totalorder %s21, 2
    %s23 = scalar_select %p22, 0, %s21
    %s24 = sadd.s32 1, %s15
    %s25 = scalar_select %p22, %s24, %s15
    %p26 = scmp.ge.s32.totalorder %s25, 1
    %s27 = scalar_select %p26, 0, %s25
    %s28 = ssub.s32 %s16, %s23
    %p29 = scmp.eq.s32.totalorder %s28, 0
    %s31 = sadd.s32 %s30, 1
    %s32 = scalar_select %p29, %s30, %s31
    %p35 = pneg %p29
    %p36 = scmp.eq.s32.totalorder %s8, 1
    %p37 = por %p35, %p36
    %p38 = scmp.ne.s32.totalorder %s30, %s33
    %p39 = scmp.eq.s32.totalorder %s8, 0
    %p40 = por %p38, %p39
    %p41 = scmp.ne.s32.totalorder %s30, %s33
    %p42 = scmp.eq.s32.totalorder %s13, 1
    %p43 = por %p41, %p42
    %p44 = scmp.ne.s32.totalorder %s33, %s34
    %p45 = scmp.eq.s32.totalorder %s13, 0
    %p46 = por %p44, %p45
    %p47 = scmp.ne.s32.totalorder %s33, %s34
    %p48 = scmp.eq.s32.totalorder %s14, 1
    %p49 = por %p47, %p48
    %p51 = scmp.ne.s32.totalorder %s34, %s50
    %p52 = scmp.eq.s32.totalorder %s14, 0
    %p53 = por %p51, %p52
    %s54 = ssub.s32 %s15, %s27
    %p55 = scmp.eq.s32.totalorder %s54, 0
    %s57 = sadd.s32 %s56, 1
    %s58 = scalar_select %p55, %s56, %s57
    %p61 = pneg %p55
    %p62 = scmp.eq.s32.totalorder %s8, 1
    %p63 = por %p61, %p62
    %p64 = scmp.ne.s32.totalorder %s56, %s59
    %p65 = scmp.eq.s32.totalorder %s8, 0
    %p66 = por %p64, %p65
    %p67 = scmp.ne.s32.totalorder %s56, %s59
    %p68 = scmp.eq.s32.totalorder %s13, 1
    %p69 = por %p67, %p68
    %p70 = scmp.ne.s32.totalorder %s59, %s60
    %p71 = scmp.eq.s32.totalorder %s13, 0
    %p72 = por %p70, %p71
    %p73 = scmp.ne.s32.totalorder %s59, %s60
    %p74 = scmp.eq.s32.totalorder %s14, 1
    %p75 = por %p73, %p74
    %p77 = scmp.ne.s32.totalorder %s60, %s76
    %p78 = scmp.eq.s32.totalorder %s14, 0
    %p79 = por %p77, %p78
    %s80 = ssub.s32 %s16, %s23
    %s81 = ssub.s32 %s15, %s27
    %s82 = sor.u32 %s80, %s81
    %p83 = scmp.eq.s32.totalorder %s82, 0
    %s85 = sadd.s32 %s84, 1
    %s86 = scalar_select %p83, %s84, %s85
    %p89 = pneg %p83
    %p90 = scmp.eq.s32.totalorder %s8, 1
    %p91 = por %p89, %p90
    %p92 = scmp.ne.s32.totalorder %s84, %s87
    %p93 = scmp.eq.s32.totalorder %s8, 0
    %p94 = por %p92, %p93
    %p95 = scmp.ne.s32.totalorder %s84, %s87
    %p96 = scmp.eq.s32.totalorder %s13, 1
    %p97 = por %p95, %p96
    %p98 = scmp.ne.s32.totalorder %s87, %s88
    %p99 = scmp.eq.s32.totalorder %s13, 0
    %p100 = por %p98, %p99
    %p101 = scmp.ne.s32.totalorder %s87, %s88
    %p102 = scmp.eq.s32.totalorder %s14, 1
    %p103 = por %p101, %p102
    %p105 = scmp.ne.s32.totalorder %s88, %s104
    %p106 = scmp.eq.s32.totalorder %s14, 0
    %p107 = por %p105, %p106
    %p108 = scmp.le.s32.totalorder 1, %s8
    %p109 = scmp.lt.s32.totalorder %s8, 3
    %p110 = pnand %p108, %p109
    %p111 = pneg %p110
    // Predicated region
    $region9: #{tpu_custom_call.1} parent=5 // pred_check
      _
    $region10: #{tpu_custom_call.1} parent=5 // pred_check_branch
      %113 = sbr.rel (%p110) target = $region12
    $region11: #{tpu_custom_call.1} parent=5 // pred_region
      %s114 = ssub.s32 %s8, 1
      // Predicated region
      $region13: #{tpu_custom_call.1} parent=11 // pred_check
        %p115 = pneg %p72
      $region14: #{tpu_custom_call.1} parent=11 // pred_check_branch
        %117 = sbr.rel (%p115) target = $region16
      $region15: #{tpu_custom_call.1} parent=11 // pred_region
        %s118 = smul.u32 2, %s17
        %p119 = scmp.lt.s32.totalorder %s118, 1
        %s120 = scalar_select %p119, %s118, 1
        %s121 = smul.addr %s120, 8
        %s122 = scalar_lea.vmem %s1, %s121
        %s123 = smul.u32 2, %s17
      $region16: #{tpu_custom_call.1} parent=11 // pred_fallthru
        _
    $region12: #{tpu_custom_call.1} parent=5 // pred_fallthru
      _
    %p124 = scmp.lt.s32.totalorder %s8, 2
    // Predicated region
    $region17: #{tpu_custom_call.1} parent=5 // pred_check
      %p125 = pneg %p124
    $region18: #{tpu_custom_call.1} parent=5 // pred_check_branch
      %127 = sbr.rel (%p125) target = $region20
    $region19: #{tpu_custom_call.1} parent=5 // pred_region
      // Predicated region
      $region21: #{tpu_custom_call.1} parent=19 // pred_check
        %p128 = pneg %p40
      $region22: #{tpu_custom_call.1} parent=19 // pred_check_branch
        %130 = sbr.rel (%p128) target = $region24
      $region23: #{tpu_custom_call.1} parent=19 // pred_region
        %s131 = smul.u32 32, %s16
        %p132 = scmp.lt.s32.totalorder %s131, 63
        %s133 = scalar_select %p132, %s131, 63
        %s134 = smul.addr %s133, 8
        %s135 = scalar_lea.vmem %s0, %s134
        %s136 = smul.u32 32, %s16
      $region24: #{tpu_custom_call.1} parent=19 // pred_fallthru
        _
    $region20: #{tpu_custom_call.1} parent=5 // pred_fallthru
      _
    %p137 = scmp.le.s32.totalorder 1, %s8
    %p138 = scmp.lt.s32.totalorder %s8, 3
    %p139 = pnand %p137, %p138
    %p140 = pneg %p139
    // Predicated region
    $region25: #{tpu_custom_call.1} parent=5 // pred_check
      _
    $region26: #{tpu_custom_call.1} parent=5 // pred_check_branch
      %142 = sbr.rel (%p139) target = $region28
    $region27: #{tpu_custom_call.1} parent=5 // pred_region
      %s143 = ssub.s32 %s8, 1
      %s144 = smul.u32 32, %s18
      %p145 = scmp.lt.s32.totalorder %s144, 63
      %s146 = scalar_select %p145, %s144, 63
      %s147 = smul.addr %s146, 8
      %s148 = scalar_lea.vmem %s0, %s147
      %p149 = pneg %p46
      %p150 = pneg %p43
      %s151 = smul.u32 2, %s17
      %p152 = scmp.lt.s32.totalorder %s151, 1
      %s153 = scalar_select %p152, %s151, 1
      %s154 = smul.addr %s153, 8
      %s155 = scalar_lea.vmem %s1, %s154
      %p156 = pneg %p72
      %p157 = pneg %p69
      %p158 = pneg %p100
      %p159 = pneg %p97
      %s160 = smul.u32 32, %s18
      %s161 = smul.u32 2, %s17
      %p162 = scmp.lt.s32.totalorder %s160, 63
      %s163 = scalar_select %p162, %s160, 63
      %p164 = scmp.lt.s32.totalorder %s161, 1
      %s165 = scalar_select %p164, %s161, 1
      %s166 = smul.addr %s163, 2
      %s167 = sadd.s32 %s165, %s166
      %s168 = smul.addr %s167, 8
      %s169 = scalar_lea.vmem %s2, %s168
      %s170 = smul.u32 32, %s18
      %p171 = scmp.lt.s32.totalorder %s170, 63
      %s172 = scalar_select %p171, %s170, 63
      %s173 = smul.addr %s172, 8
      %s174 = scalar_lea.vmem %s0, %s173
      %s175 = smul.u32 32, %s18
      %s176 = smul.u32 2, %s17
      %p177 = scmp.lt.s32.totalorder %s176, 1
      %s178 = scalar_select %p177, %s176, 1
      %s179 = smul.addr %s178, 8
      %s180 = scalar_lea.vmem %s1, %s179
      %s181 = smul.u32 2, %s17
      %s182 = smul.u32 32, %s18
      %s183 = smul.u32 2, %s17
      %p184 = scmp.lt.s32.totalorder %s182, 63
      %s185 = scalar_select %p184, %s182, 63
      %p186 = scmp.lt.s32.totalorder %s183, 1
      %s187 = scalar_select %p186, %s183, 1
      %s188 = smul.addr %s185, 2
      %s189 = sadd.s32 %s187, %s188
      %s190 = smul.addr %s189, 8
      %s191 = scalar_lea.vmem %s2, %s190
      %s192 = smul.u32 32, %s18
      %s193 = smul.u32 2, %s17
      %v194 = vld [vmem:[%s174] sm:$0xff]
      %v195 = vld [vmem:[%s174 + $0x8] sm:$0xff]
      %v196 = vld [vmem:[%s174 + $0x10] sm:$0xff]
      %v197 = vld [vmem:[%s174 + $0x18] sm:$0xff]
      %v198 = vld [vmem:[%s174 + $0x20] sm:$0xff]
      %v199 = vld [vmem:[%s174 + $0x28] sm:$0xff]
      %v200 = vld [vmem:[%s174 + $0x30] sm:$0xff]
      %v201 = vld [vmem:[%s174 + $0x38] sm:$0xff]
      %v202 = vld [vmem:[%s174 + $0x40] sm:$0xff]
      %v203 = vld [vmem:[%s174 + $0x48] sm:$0xff]
      %v204 = vld [vmem:[%s174 + $0x50] sm:$0xff]
      %v205 = vld [vmem:[%s174 + $0x58] sm:$0xff]
      %v206 = vld [vmem:[%s174 + $0x60] sm:$0xff]
      %v207 = vld [vmem:[%s174 + $0x68] sm:$0xff]
      %v208 = vld [vmem:[%s174 + $0x70] sm:$0xff]
      %v209 = vld [vmem:[%s174 + $0x78] sm:$0xff]
      %v210 = vld [vmem:[%s174 + $0x80] sm:$0xff]
      %v211 = vld [vmem:[%s174 + $0x88] sm:$0xff]
      %v212 = vld [vmem:[%s174 + $0x90] sm:$0xff]
      %v213 = vld [vmem:[%s174 + $0x98] sm:$0xff]
      %v214 = vld [vmem:[%s174 + $0xa0] sm:$0xff]
      %v215 = vld [vmem:[%s174 + $0xa8] sm:$0xff]
      %v216 = vld [vmem:[%s174 + $0xb0] sm:$0xff]
      %v217 = vld [vmem:[%s174 + $0xb8] sm:$0xff]
      %v218 = vld [vmem:[%s174 + $0xc0] sm:$0xff]
      %v219 = vld [vmem:[%s174 + $0xc8] sm:$0xff]
      %v220 = vld [vmem:[%s174 + $0xd0] sm:$0xff]
      %v221 = vld [vmem:[%s174 + $0xd8] sm:$0xff]
      %v222 = vld [vmem:[%s174 + $0xe0] sm:$0xff]
      %v223 = vld [vmem:[%s174 + $0xe8] sm:$0xff]
      %v224 = vld [vmem:[%s174 + $0xf0] sm:$0xff]
      %v225 = vld [vmem:[%s174 + $0xf8] sm:$0xff]
      %v226 = vld [vmem:[%s180] sm:$0xff]
      %v227 = vld [vmem:[%s180 + $0x8] sm:$0xff]
      %v228 = vld [vmem:[%s180 + $0x10] sm:$0xff]
      %v229 = vld [vmem:[%s180 + $0x18] sm:$0xff]
      %v230 = vld [vmem:[%s180 + $0x20] sm:$0xff]
      %v231 = vld [vmem:[%s180 + $0x28] sm:$0xff]
      %v232 = vld [vmem:[%s180 + $0x30] sm:$0xff]
      %v233 = vld [vmem:[%s180 + $0x38] sm:$0xff]
      %v234 = vld [vmem:[%s180 + $0x40] sm:$0xff]
      %v235 = vld [vmem:[%s180 + $0x48] sm:$0xff]
      %v236 = vld [vmem:[%s180 + $0x50] sm:$0xff]
      %v237 = vld [vmem:[%s180 + $0x58] sm:$0xff]
      %v238 = vld [vmem:[%s180 + $0x60] sm:$0xff]
      %v239 = vld [vmem:[%s180 + $0x68] sm:$0xff]
      %v240 = vld [vmem:[%s180 + $0x70] sm:$0xff]
      %v241 = vld [vmem:[%s180 + $0x78] sm:$0xff]
      %vm242 = vcmask 523264
      %v244 = vsel %vm242, %v194, 0
      %v247 = vsel %vm242, %v195, 0
      %v250 = vsel %vm242, %v196, 0
      %v253 = vsel %vm242, %v197, 0
      %v256 = vsel %vm242, %v198, 0
      %v259 = vsel %vm242, %v199, 0
      %v262 = vsel %vm242, %v200, 0
      %v265 = vsel %vm242, %v201, 0
      %v268 = vsel %vm242, %v202, 0
      %v271 = vsel %vm242, %v203, 0
      %v274 = vsel %vm242, %v204, 0
      %v277 = vsel %vm242, %v205, 0
      %v280 = vsel %vm242, %v206, 0
      %v283 = vsel %vm242, %v207, 0
      %v286 = vsel %vm242, %v208, 0
      %v289 = vsel %vm242, %v209, 0
      %v292 = vsel %vm242, %v210, 0
      %v295 = vsel %vm242, %v211, 0
      %v298 = vsel %vm242, %v212, 0
      %v301 = vsel %vm242, %v213, 0
      %v304 = vsel %vm242, %v214, 0
      %v307 = vsel %vm242, %v215, 0
      %v310 = vsel %vm242, %v216, 0
      %v313 = vsel %vm242, %v217, 0
      %v316 = vsel %vm242, %v218, 0
      %v319 = vsel %vm242, %v219, 0
      %v322 = vsel %vm242, %v220, 0
      %v325 = vsel %vm242, %v221, 0
      %v328 = vsel %vm242, %v222, 0
      %v331 = vsel %vm242, %v223, 0
      %v334 = vsel %vm242, %v224, 0
      %v337 = vsel %vm242, %v225, 0
      %339 = vmatpush.msra.mxu0 0.0
      %340 = vmatpush.msra.mxu0 0.0
      %341 = vmatpush.msra.mxu0 0.0
      %342 = vmatpush.msra.mxu0 0.0
      %343 = vmatpush.msra.mxu0 0.0
      %344 = vmatpush.msra.mxu0 0.0
      %345 = vmatpush.msra.mxu0 0.0
      %346 = vmatpush.msra.mxu0 0.0
      %347 = vmatpush.msra.mxu0 %v240
      %348 = vmatpush.msra.mxu0 %v238
      %349 = vmatpush.msra.mxu0 %v236
      %350 = vmatpush.msra.mxu0 %v234
      %351 = vmatpush.msra.mxu0 %v232
      %352 = vmatpush.msra.mxu0 %v230
      %353 = vmatpush.msra.mxu0 %v228
      %354 = vmatpush.msra.mxu0 %v226
      %355 = vmatmul.f32.gmra.mxu0 %v244
      %v356 = vpop.f32.mrf.mxu0
      %v357 = vadd.f32 0.0, %v356
      %358 = vmatmul.f32.gmra.mxu0 %v247
      %v359 = vpop.f32.mrf.mxu0
      %v360 = vadd.f32 0.0, %v359
      %361 = vmatmul.f32.gmra.mxu0 %v250
      %v362 = vpop.f32.mrf.mxu0
      %v363 = vadd.f32 0.0, %v362
      %364 = vmatmul.f32.gmra.mxu0 %v253
      %v365 = vpop.f32.mrf.mxu0
      %v366 = vadd.f32 0.0, %v365
      %367 = vmatmul.f32.gmra.mxu0 %v256
      %v368 = vpop.f32.mrf.mxu0
      %v369 = vadd.f32 0.0, %v368
      %370 = vmatmul.f32.gmra.mxu0 %v259
      %v371 = vpop.f32.mrf.mxu0
      %v372 = vadd.f32 0.0, %v371
      %373 = vmatmul.f32.gmra.mxu0 %v262
      %v374 = vpop.f32.mrf.mxu0
      %v375 = vadd.f32 0.0, %v374
      %376 = vmatmul.f32.gmra.mxu0 %v265
      %v377 = vpop.f32.mrf.mxu0
      %v378 = vadd.f32 0.0, %v377
      %379 = vmatmul.f32.gmra.mxu0 %v268
      %v380 = vpop.f32.mrf.mxu0
      %v381 = vadd.f32 0.0, %v380
      %382 = vmatmul.f32.gmra.mxu0 %v271
      %v383 = vpop.f32.mrf.mxu0
      %v384 = vadd.f32 0.0, %v383
      %385 = vmatmul.f32.gmra.mxu0 %v274
      %v386 = vpop.f32.mrf.mxu0
      %v387 = vadd.f32 0.0, %v386
      %388 = vmatmul.f32.gmra.mxu0 %v277
      %v389 = vpop.f32.mrf.mxu0
      %v390 = vadd.f32 0.0, %v389
      %391 = vmatmul.f32.gmra.mxu0 %v280
      %v392 = vpop.f32.mrf.mxu0
      %v393 = vadd.f32 0.0, %v392
      %394 = vmatmul.f32.gmra.mxu0 %v283
      %v395 = vpop.f32.mrf.mxu0
      %v396 = vadd.f32 0.0, %v395
      %397 = vmatmul.f32.gmra.mxu0 %v286
      %v398 = vpop.f32.mrf.mxu0
      %v399 = vadd.f32 0.0, %v398
      %400 = vmatmul.f32.gmra.mxu0 %v289
      %v401 = vpop.f32.mrf.mxu0
      %v402 = vadd.f32 0.0, %v401
      %403 = vmatmul.f32.gmra.mxu0 %v292
      %v404 = vpop.f32.mrf.mxu0
      %v405 = vadd.f32 0.0, %v404
      %406 = vmatmul.f32.gmra.mxu0 %v295
      %v407 = vpop.f32.mrf.mxu0
      %v408 = vadd.f32 0.0, %v407
      %409 = vmatmul.f32.gmra.mxu0 %v298
      %v410 = vpop.f32.mrf.mxu0
      %v411 = vadd.f32 0.0, %v410
      %412 = vmatmul.f32.gmra.mxu0 %v301
      %v413 = vpop.f32.mrf.mxu0
      %v414 = vadd.f32 0.0, %v413
      %415 = vmatmul.f32.gmra.mxu0 %v304
      %v416 = vpop.f32.mrf.mxu0
      %v417 = vadd.f32 0.0, %v416
      %418 = vmatmul.f32.gmra.mxu0 %v307
      %v419 = vpop.f32.mrf.mxu0
      %v420 = vadd.f32 0.0, %v419
      %421 = vmatmul.f32.gmra.mxu0 %v310
      %v422 = vpop.f32.mrf.mxu0
      %v423 = vadd.f32 0.0, %v422
      %424 = vmatmul.f32.gmra.mxu0 %v313
      %v425 = vpop.f32.mrf.mxu0
      %v426 = vadd.f32 0.0, %v425
      %427 = vmatmul.f32.gmra.mxu0 %v316
      %v428 = vpop.f32.mrf.mxu0
      %v429 = vadd.f32 0.0, %v428
      %430 = vmatmul.f32.gmra.mxu0 %v319
      %v431 = vpop.f32.mrf.mxu0
      %v432 = vadd.f32 0.0, %v431
      %433 = vmatmul.f32.gmra.mxu0 %v322
      %v434 = vpop.f32.mrf.mxu0
      %v435 = vadd.f32 0.0, %v434
      %436 = vmatmul.f32.gmra.mxu0 %v325
      %v437 = vpop.f32.mrf.mxu0
      %v438 = vadd.f32 0.0, %v437
      %439 = vmatmul.f32.gmra.mxu0 %v328
      %v440 = vpop.f32.mrf.mxu0
      %v441 = vadd.f32 0.0, %v440
      %442 = vmatmul.f32.gmra.mxu0 %v331
      %v443 = vpop.f32.mrf.mxu0
      %v444 = vadd.f32 0.0, %v443
      %445 = vmatmul.f32.gmra.mxu0 %v334
      %v446 = vpop.f32.mrf.mxu0
      %v447 = vadd.f32 0.0, %v446
      %448 = vmatmul.f32.gmra.mxu0 %v337
      %v449 = vpop.f32.mrf.mxu0
      %v450 = vadd.f32 0.0, %v449
      %451 = vdwg.mxu0
      %452 = vmatpush.msra.mxu0 0.0
      %453 = vmatpush.msra.mxu0 0.0
      %454 = vmatpush.msra.mxu0 0.0
      %455 = vmatpush.msra.mxu0 0.0
      %456 = vmatpush.msra.mxu0 0.0
      %457 = vmatpush.msra.mxu0 0.0
      %458 = vmatpush.msra.mxu0 0.0
      %459 = vmatpush.msra.mxu0 0.0
      %460 = vmatpush.msra.mxu0 %v241
      %461 = vmatpush.msra.mxu0 %v239
      %462 = vmatpush.msra.mxu0 %v237
      %463 = vmatpush.msra.mxu0 %v235
      %464 = vmatpush.msra.mxu0 %v233
      %465 = vmatpush.msra.mxu0 %v231
      %466 = vmatpush.msra.mxu0 %v229
      %467 = vmatpush.msra.mxu0 %v227
      %468 = vmatmul.f32.gmra.mxu0 %v244
      %v469 = vpop.f32.mrf.mxu0
      %v470 = vadd.f32 0.0, %v469
      %471 = vmatmul.f32.gmra.mxu0 %v247
      %v472 = vpop.f32.mrf.mxu0
      %v473 = vadd.f32 0.0, %v472
      %474 = vmatmul.f32.gmra.mxu0 %v250
      %v475 = vpop.f32.mrf.mxu0
      %v476 = vadd.f32 0.0, %v475
      %477 = vmatmul.f32.gmra.mxu0 %v253
      %v478 = vpop.f32.mrf.mxu0
      %v479 = vadd.f32 0.0, %v478
      %480 = vmatmul.f32.gmra.mxu0 %v256
      %v481 = vpop.f32.mrf.mxu0
      %v482 = vadd.f32 0.0, %v481
      %483 = vmatmul.f32.gmra.mxu0 %v259
      %v484 = vpop.f32.mrf.mxu0
      %v485 = vadd.f32 0.0, %v484
      %486 = vmatmul.f32.gmra.mxu0 %v262
      %v487 = vpop.f32.mrf.mxu0
      %v488 = vadd.f32 0.0, %v487
      %489 = vmatmul.f32.gmra.mxu0 %v265
      %v490 = vpop.f32.mrf.mxu0
      %v491 = vadd.f32 0.0, %v490
      %492 = vmatmul.f32.gmra.mxu0 %v268
      %v493 = vpop.f32.mrf.mxu0
      %v494 = vadd.f32 0.0, %v493
      %495 = vmatmul.f32.gmra.mxu0 %v271
      %v496 = vpop.f32.mrf.mxu0
      %v497 = vadd.f32 0.0, %v496
      %498 = vmatmul.f32.gmra.mxu0 %v274
      %v499 = vpop.f32.mrf.mxu0
      %v500 = vadd.f32 0.0, %v499
      %501 = vmatmul.f32.gmra.mxu0 %v277
      %v502 = vpop.f32.mrf.mxu0
      %v503 = vadd.f32 0.0, %v502
      %504 = vmatmul.f32.gmra.mxu0 %v280
      %v505 = vpop.f32.mrf.mxu0
      %v506 = vadd.f32 0.0, %v505
      %507 = vmatmul.f32.gmra.mxu0 %v283
      %v508 = vpop.f32.mrf.mxu0
      %v509 = vadd.f32 0.0, %v508
      %510 = vmatmul.f32.gmra.mxu0 %v286
      %v511 = vpop.f32.mrf.mxu0
      %v512 = vadd.f32 0.0, %v511
      %513 = vmatmul.f32.gmra.mxu0 %v289
      %v514 = vpop.f32.mrf.mxu0
      %v515 = vadd.f32 0.0, %v514
      %516 = vmatmul.f32.gmra.mxu0 %v292
      %v517 = vpop.f32.mrf.mxu0
      %v518 = vadd.f32 0.0, %v517
      %519 = vmatmul.f32.gmra.mxu0 %v295
      %v520 = vpop.f32.mrf.mxu0
      %v521 = vadd.f32 0.0, %v520
      %522 = vmatmul.f32.gmra.mxu0 %v298
      %v523 = vpop.f32.mrf.mxu0
      %v524 = vadd.f32 0.0, %v523
      %525 = vmatmul.f32.gmra.mxu0 %v301
      %v526 = vpop.f32.mrf.mxu0
      %v527 = vadd.f32 0.0, %v526
      %528 = vmatmul.f32.gmra.mxu0 %v304
      %v529 = vpop.f32.mrf.mxu0
      %v530 = vadd.f32 0.0, %v529
      %531 = vmatmul.f32.gmra.mxu0 %v307
      %v532 = vpop.f32.mrf.mxu0
      %v533 = vadd.f32 0.0, %v532
      %534 = vmatmul.f32.gmra.mxu0 %v310
      %v535 = vpop.f32.mrf.mxu0
      %v536 = vadd.f32 0.0, %v535
      %537 = vmatmul.f32.gmra.mxu0 %v313
      %v538 = vpop.f32.mrf.mxu0
      %v539 = vadd.f32 0.0, %v538
      %540 = vmatmul.f32.gmra.mxu0 %v316
      %v541 = vpop.f32.mrf.mxu0
      %v542 = vadd.f32 0.0, %v541
      %543 = vmatmul.f32.gmra.mxu0 %v319
      %v544 = vpop.f32.mrf.mxu0
      %v545 = vadd.f32 0.0, %v544
      %546 = vmatmul.f32.gmra.mxu0 %v322
      %v547 = vpop.f32.mrf.mxu0
      %v548 = vadd.f32 0.0, %v547
      %549 = vmatmul.f32.gmra.mxu0 %v325
      %v550 = vpop.f32.mrf.mxu0
      %v551 = vadd.f32 0.0, %v550
      %552 = vmatmul.f32.gmra.mxu0 %v328
      %v553 = vpop.f32.mrf.mxu0
      %v554 = vadd.f32 0.0, %v553
      %555 = vmatmul.f32.gmra.mxu0 %v331
      %v556 = vpop.f32.mrf.mxu0
      %v557 = vadd.f32 0.0, %v556
      %558 = vmatmul.f32.gmra.mxu0 %v334
      %v559 = vpop.f32.mrf.mxu0
      %v560 = vadd.f32 0.0, %v559
      %561 = vmatmul.f32.gmra.mxu0 %v337
      %v562 = vpop.f32.mrf.mxu0
      %v563 = vadd.f32 0.0, %v562
      %564 = vdwg.mxu0
      %565 = vst [vmem:[%s191] sm:$0xff] %v357
      %566 = vst.msk [vmem:[%s191 + $0x8] sm:$0xff] %vm242, %v470
      %567 = vst [vmem:[%s191 + $0x10] sm:$0xff] %v360
      %568 = vst.msk [vmem:[%s191 + $0x18] sm:$0xff] %vm242, %v473
      %569 = vst [vmem:[%s191 + $0x20] sm:$0xff] %v363
      %570 = vst.msk [vmem:[%s191 + $0x28] sm:$0xff] %vm242, %v476
      %571 = vst [vmem:[%s191 + $0x30] sm:$0xff] %v366
      %572 = vst.msk [vmem:[%s191 + $0x38] sm:$0xff] %vm242, %v479
      %573 = vst [vmem:[%s191 + $0x40] sm:$0xff] %v369
      %574 = vst.msk [vmem:[%s191 + $0x48] sm:$0xff] %vm242, %v482
      %575 = vst [vmem:[%s191 + $0x50] sm:$0xff] %v372
      %576 = vst.msk [vmem:[%s191 + $0x58] sm:$0xff] %vm242, %v485
      %577 = vst [vmem:[%s191 + $0x60] sm:$0xff] %v375
      %578 = vst.msk [vmem:[%s191 + $0x68] sm:$0xff] %vm242, %v488
      %579 = vst [vmem:[%s191 + $0x70] sm:$0xff] %v378
      %580 = vst.msk [vmem:[%s191 + $0x78] sm:$0xff] %vm242, %v491
      %581 = vst [vmem:[%s191 + $0x80] sm:$0xff] %v381
      %582 = vst.msk [vmem:[%s191 + $0x88] sm:$0xff] %vm242, %v494
      %583 = vst [vmem:[%s191 + $0x90] sm:$0xff] %v384
      %584 = vst.msk [vmem:[%s191 + $0x98] sm:$0xff] %vm242, %v497
      %585 = vst [vmem:[%s191 + $0xa0] sm:$0xff] %v387
      %586 = vst.msk [vmem:[%s191 + $0xa8] sm:$0xff] %vm242, %v500
      %587 = vst [vmem:[%s191 + $0xb0] sm:$0xff] %v390
      %588 = vst.msk [vmem:[%s191 + $0xb8] sm:$0xff] %vm242, %v503
      %589 = vst [vmem:[%s191 + $0xc0] sm:$0xff] %v393
      %590 = vst.msk [vmem:[%s191 + $0xc8] sm:$0xff] %vm242, %v506
      %591 = vst [vmem:[%s191 + $0xd0] sm:$0xff] %v396
      %592 = vst.msk [vmem:[%s191 + $0xd8] sm:$0xff] %vm242, %v509
      %593 = vst [vmem:[%s191 + $0xe0] sm:$0xff] %v399
      %594 = vst.msk [vmem:[%s191 + $0xe8] sm:$0xff] %vm242, %v512
      %595 = vst [vmem:[%s191 + $0xf0] sm:$0xff] %v402
      %596 = vst.msk [vmem:[%s191 + $0xf8] sm:$0xff] %vm242, %v515
      %597 = vst [vmem:[%s191 + $0x100] sm:$0xff] %v405
      %598 = vst.msk [vmem:[%s191 + $0x108] sm:$0xff] %vm242, %v518
      %599 = vst [vmem:[%s191 + $0x110] sm:$0xff] %v408
      %600 = vst.msk [vmem:[%s191 + $0x118] sm:$0xff] %vm242, %v521
      %601 = vst [vmem:[%s191 + $0x120] sm:$0xff] %v411
      %602 = vst.msk [vmem:[%s191 + $0x128] sm:$0xff] %vm242, %v524
      %603 = vst [vmem:[%s191 + $0x130] sm:$0xff] %v414
      %604 = vst.msk [vmem:[%s191 + $0x138] sm:$0xff] %vm242, %v527
      %605 = vst [vmem:[%s191 + $0x140] sm:$0xff] %v417
      %606 = vst.msk [vmem:[%s191 + $0x148] sm:$0xff] %vm242, %v530
      %607 = vst [vmem:[%s191 + $0x150] sm:$0xff] %v420
      %608 = vst.msk [vmem:[%s191 + $0x158] sm:$0xff] %vm242, %v533
      %609 = vst [vmem:[%s191 + $0x160] sm:$0xff] %v423
      %610 = vst.msk [vmem:[%s191 + $0x168] sm:$0xff] %vm242, %v536
      %611 = vst [vmem:[%s191 + $0x170] sm:$0xff] %v426
      %612 = vst.msk [vmem:[%s191 + $0x178] sm:$0xff] %vm242, %v539
      %613 = vst [vmem:[%s191 + $0x180] sm:$0xff] %v429
      %614 = vst.msk [vmem:[%s191 + $0x188] sm:$0xff] %vm242, %v542
      %615 = vst [vmem:[%s191 + $0x190] sm:$0xff] %v432
      %616 = vst.msk [vmem:[%s191 + $0x198] sm:$0xff] %vm242, %v545
      %617 = vst [vmem:[%s191 + $0x1a0] sm:$0xff] %v435
      %618 = vst.msk [vmem:[%s191 + $0x1a8] sm:$0xff] %vm242, %v548
      %619 = vst [vmem:[%s191 + $0x1b0] sm:$0xff] %v438
      %620 = vst.msk [vmem:[%s191 + $0x1b8] sm:$0xff] %vm242, %v551
      %621 = vst [vmem:[%s191 + $0x1c0] sm:$0xff] %v441
      %622 = vst.msk [vmem:[%s191 + $0x1c8] sm:$0xff] %vm242, %v554
      %623 = vst [vmem:[%s191 + $0x1d0] sm:$0xff] %v444
      %624 = vst.msk [vmem:[%s191 + $0x1d8] sm:$0xff] %vm242, %v557
      %625 = vst [vmem:[%s191 + $0x1e0] sm:$0xff] %v447
      %626 = vst.msk [vmem:[%s191 + $0x1e8] sm:$0xff] %vm242, %v560
      %627 = vst [vmem:[%s191 + $0x1f0] sm:$0xff] %v450
      %628 = vst.msk [vmem:[%s191 + $0x1f8] sm:$0xff] %vm242, %v563
      %s629 = smul.u32 32, %s18
      %s630 = smul.u32 2, %s17
      %p631 = scmp.lt.s32.totalorder %s629, 63
      %s632 = scalar_select %p631, %s629, 63
      %p633 = scmp.lt.s32.totalorder %s630, 1
      %s634 = scalar_select %p633, %s630, 1
      %s635 = smul.addr %s632, 2
      %s636 = sadd.s32 %s634, %s635
      %s637 = smul.addr %s636, 8
      %s638 = scalar_lea.vmem %s2, %s637
      // Predicated region
      $region29: #{tpu_custom_call.1} parent=27 // pred_check
        %p639 = pneg %p97
      $region30: #{tpu_custom_call.1} parent=27 // pred_check_branch
        %641 = sbr.rel (%p639) target = $region32
      $region31: #{tpu_custom_call.1} parent=27 // pred_region
        %s642 = smul.u32 32, %s18
        %s643 = smul.u32 2, %s17
      $region32: #{tpu_custom_call.1} parent=27 // pred_fallthru
        _
    $region28: #{tpu_custom_call.1} parent=5 // pred_fallthru
      _
    %p644 = scmp.le.s32.totalorder 2, %s8
    // Predicated region
    $region33: #{tpu_custom_call.1} parent=5 // pred_check
      %p645 = pneg %p644
    $region34: #{tpu_custom_call.1} parent=5 // pred_check_branch
      %647 = sbr.rel (%p645) target = $region36
    $region35: #{tpu_custom_call.1} parent=5 // pred_region
      %s648 = ssub.s32 %s8, 2
      // Predicated region
      $region37: #{tpu_custom_call.1} parent=35 // pred_check
        %p649 = pneg %p103
      $region38: #{tpu_custom_call.1} parent=35 // pred_check_branch
        %651 = sbr.rel (%p649) target = $region40
      $region39: #{tpu_custom_call.1} parent=35 // pred_region
        %s652 = smul.u32 32, %s20
        %s653 = smul.u32 2, %s19
        %p654 = scmp.lt.s32.totalorder %s652, 63
        %s655 = scalar_select %p654, %s652, 63
        %p656 = scmp.lt.s32.totalorder %s653, 1
        %s657 = scalar_select %p656, %s653, 1
        %s658 = smul.addr %s655, 2
        %s659 = sadd.s32 %s657, %s658
        %s660 = smul.addr %s659, 8
        %s661 = scalar_lea.vmem %s2, %s660
      $region40: #{tpu_custom_call.1} parent=35 // pred_fallthru
        _
    $region36: #{tpu_custom_call.1} parent=5 // pred_fallthru
      _
  $region6: #{tpu_custom_call.1} parent=0 // loop_footer
    %s12 = sadd.s32 1, %s8
  $region7: #{tpu_custom_call.1} parent=0 // loop_footer_branch
    %7 = sbr.rel target = $region3
  $region8: #{tpu_custom_call.1} parent=0 // loop_exit
    _

</llo_original>
